<compile_context>
chip_gen: v5e
topology: v5e:2x2
jax: 0.10.0
libtpu: 0.0.40
codegen_flags: <defaults>
</compile_context>

<pallas_src>
import functools

import jax
import jax.numpy as jnp
import numpy as np
from jax.experimental import pallas as pl
from jax.experimental.pallas import tpu as pltpu


# ---------------------------------------------------------------------------
# Helpers
# ---------------------------------------------------------------------------
def _round_up(x, m):
    return ((x + m - 1) // m) * m


def _vmem_limit_bytes():
    """Generation-aware scoped-VMEM limit: ~3/4 of physical, capped at 96 MiB
    (v5e/v6e have 128 MiB physical; v7x only 64 MiB -> 48 MiB limit)."""
    cap = None
    try:
        info = pltpu.get_tpu_info()
        cap = int(getattr(info, "vmem_capacity_bytes"))
    except Exception:
        cap = None
    if not cap or cap <= 0:
        cap = 64 * 1024 * 1024          # conservative (v7x-sized) fallback
    return min((cap * 3) // 4, 96 * 1024 * 1024)


def _choose_tile_t(T, bytes_per_row, fixed_bytes, vmem_limit_bytes, frac=0.6):
    """Largest row tile (multiple of 8, dividing T) such that the pipelined
    footprint (bytes_per_row already includes double-buffering factors) plus
    the resident weights stays within a fraction of the VMEM limit."""
    budget = int(vmem_limit_bytes * frac) - int(fixed_bytes)
    max_rows = max(8, budget // max(int(bytes_per_row), 1))
    cap = min(T, max_rows)
    cap -= cap % 8
    t = cap
    while t >= 8:
        if T % t == 0:
            return t
        t -= 8
    # T < 8 or not a multiple of 8: a full-T block is always layout-legal.
    # TODO(synk): cdiv grid + masked partial tiles for huge non-8-divisible T.
    return T


def _expand_mats(rank):
    """0/1 expansion matrices so that (a @ E1) * (bp @ E2) builds the flattened
    outer product z[t, k*r + o] = a[t, k] * bp[t, o] without in-kernel reshape
    of a lane-minor (T, r, r) value. 0/1 entries are exact in bf16."""
    idx = np.arange(rank * rank)
    e1 = np.zeros((rank, rank * rank), np.float32)
    e2 = np.zeros((rank, rank * rank), np.float32)
    e1[idx // rank, idx] = 1.0
    e2[idx % rank, idx] = 1.0
    return (jnp.asarray(e1).astype(jnp.bfloat16),
            jnp.asarray(e2).astype(jnp.bfloat16))


def _pad_last(arr, dp):
    d = arr.shape[-1]
    if d == dp:
        return arr
    pad = [(0, 0)] * (arr.ndim - 1) + [(0, dp - d)]
    return jnp.pad(arr, pad)


# ---------------------------------------------------------------------------
# Stage 1 kernel (per modal): fused bf16 projection -> a, b factors ->
# accumulate a^T b over the T axis into a f32 VMEM scratch -> M_qk = acc / T.
# Grid: (B, num_T_tiles); T axis is "arbitrary" (reduction).
# ---------------------------------------------------------------------------
def _stage1_kernel(inv_t, x_ref, w4_ref, b4_ref, m_ref, acc_ref):
    t_idx = pl.program_id(1)

    @pl.when(t_idx == 0)
    def _():
        acc_ref[...] = jnp.zeros_like(acc_ref)

    r = acc_ref.shape[0]
    x = x_ref[0]                                                  # (tT, Dp) f32
    proj = jnp.dot(x.astype(jnp.bfloat16), w4_ref[...],
                   preferred_element_type=jnp.float32) + b4_ref[...]  # (tT, 4r)
    prod = proj[:, :2 * r] * proj[:, 2 * r:]                      # [a | b] f32
    a = prod[:, :r]
    b = prod[:, r:]
    # a^T @ b  (contract over the row/T axis), bf16 MXU / f32 accumulate.
    acc_ref[...] += jax.lax.dot_general(
        a.astype(jnp.bfloat16), b.astype(jnp.bfloat16),
        (((0,), (0,)), ((), ())), preferred_element_type=jnp.float32)

    @pl.when(t_idx == pl.num_programs(1) - 1)
    def _():
        m_ref[0] = acc_ref[...] * inv_t


def stage1(xp, w4_bf, b4, vmem_limit):
    B, T, Dp = xp.shape
    r4 = w4_bf.shape[1]
    r = r4 // 4
    # Resident (constant-index) bytes, x2 for default double buffering.
    fixed = 2 * (Dp * r4 * 2 + r4 * 4 + r * r * 4) + r * r * 4
    tile_t = _choose_tile_t(T, bytes_per_row=2 * Dp * 4, fixed_bytes=fixed,
                            vmem_limit_bytes=vmem_limit)
    nt = T // tile_t
    flops = int(B * T * (2 * Dp * r4 + 2 * r * r))
    bytes_accessed = int(B * T * Dp * 4 + Dp * r4 * 2 + B * r * r * 4)
    kern = functools.partial(_stage1_kernel, 1.0 / float(T))
    return pl.pallas_call(
        kern,
        out_shape=jax.ShapeDtypeStruct((B, r, r), jnp.float32),
        grid=(B, nt),
        in_specs=[pl.BlockSpec((1, tile_t, Dp), lambda i, t: (i, t, 0)),
                  pl.BlockSpec((Dp, r4), lambda i, t: (0, 0)),
                  pl.BlockSpec((1, r4), lambda i, t: (0, 0))],
        out_specs=pl.BlockSpec((1, r, r), lambda i, t: (i, 0, 0)),
        scratch_shapes=[pltpu.VMEM((r, r), jnp.float32)],
        compiler_params=pltpu.CompilerParams(
            dimension_semantics=("parallel", "arbitrary"),
            vmem_limit_bytes=int(vmem_limit)),
        cost_estimate=pl.CostEstimate(flops=flops, transcendentals=0,
                                      bytes_accessed=bytes_accessed),
    )(xp, w4_bf, b4)


# ---------------------------------------------------------------------------
# Stage 2 kernel (per modal): recompute a, b from x with the fused bf16
# projection, apply the wrapper-precomputed P, build the flattened outer
# product via the E1/E2 expansion matmuls, one (tT, r^2) x (r^2, Dp) matmul,
# then out = (att + beta) * x.  Grid: (B, num_T_tiles), both axes parallel.
# ---------------------------------------------------------------------------
def _stage2_kernel(beta, x_ref, w4_ref, b4_ref, p_ref, e1_ref, e2_ref,
                   watt_ref, batt_ref, o_ref):
    r = e1_ref.shape[0]
    x = x_ref[0]                                                  # (tT, Dp) f32
    proj = jnp.dot(x.astype(jnp.bfloat16), w4_ref[...],
                   preferred_element_type=jnp.float32) + b4_ref[...]  # (tT, 4r)
    prod = proj[:, :2 * r] * proj[:, 2 * r:]                      # [a | b] f32
    a = prod[:, :r]                                               # (tT, r)
    b = prod[:, r:]                                               # (tT, r)

    p = p_ref[0].astype(jnp.bfloat16)                             # (r, r)
    bp = jnp.dot(b.astype(jnp.bfloat16), p,
                 preferred_element_type=jnp.float32)              # (tT, r)
    za = jnp.dot(a.astype(jnp.bfloat16), e1_ref[...],
                 preferred_element_type=jnp.float32)              # (tT, r*r)
    zb = jnp.dot(bp.astype(jnp.bfloat16), e2_ref[...],
                 preferred_element_type=jnp.float32)              # (tT, r*r)
    y = jnp.dot((za * zb).astype(jnp.bfloat16), watt_ref[...],
                preferred_element_type=jnp.float32) + batt_ref[...]   # (tT, Dp)
    o_ref[0] = (y + beta) * x                                     # f32 elementwise


def stage2(xp, w4_bf, b4, p_mat, watt_bf, batt, e1, e2, beta, vmem_limit):
    B, T, Dp = xp.shape
    r4 = w4_bf.shape[1]
    r = r4 // 4
    rr = r * r
    # Resident (constant-index) bytes, x2 for default double buffering.
    fixed = 2 * (Dp * r4 * 2 + r4 * 4 + rr * 4 + 2 * r * rr * 2
                 + rr * Dp * 2 + Dp * 4)
    # Pipelined per-row bytes: f32 x block in + f32 out block, double buffered.
    tile_t = _choose_tile_t(T, bytes_per_row=2 * Dp * 4 + 2 * Dp * 4,
                            fixed_bytes=fixed, vmem_limit_bytes=vmem_limit)
    nt = T // tile_t
    flops = int(B * T * (2 * Dp * r4 + 2 * rr + 4 * r * rr + 2 * rr * Dp + 3 * Dp))
    bytes_accessed = int(2 * B * T * Dp * 4 + Dp * r4 * 2 + rr * Dp * 2)
    kern = functools.partial(_stage2_kernel, float(beta))
    return pl.pallas_call(
        kern,
        out_shape=jax.ShapeDtypeStruct((B, T, Dp), jnp.float32),
        grid=(B, nt),
        in_specs=[pl.BlockSpec((1, tile_t, Dp), lambda i, t: (i, t, 0)),
                  pl.BlockSpec((Dp, r4), lambda i, t: (0, 0)),
                  pl.BlockSpec((1, r4), lambda i, t: (0, 0)),
                  pl.BlockSpec((1, r, r), lambda i, t: (i, 0, 0)),
                  pl.BlockSpec((r, rr), lambda i, t: (0, 0)),
                  pl.BlockSpec((r, rr), lambda i, t: (0, 0)),
                  pl.BlockSpec((rr, Dp), lambda i, t: (0, 0)),
                  pl.BlockSpec((1, Dp), lambda i, t: (0, 0))],
        out_specs=pl.BlockSpec((1, tile_t, Dp), lambda i, t: (i, t, 0)),
        compiler_params=pltpu.CompilerParams(
            dimension_semantics=("parallel", "parallel"),
            vmem_limit_bytes=int(vmem_limit)),
        cost_estimate=pl.CostEstimate(flops=flops, transcendentals=0,
                                      bytes_accessed=bytes_accessed),
    )(xp, w4_bf, b4, p_mat, e1, e2, watt_bf, batt)


# ---------------------------------------------------------------------------
# MMAttention forward
# ---------------------------------------------------------------------------
def mm_attention_forward(xs, params, beta):
    n = len(xs)
    vmem_limit = _vmem_limit_bytes()

    # Wrapper-side prep: zero-pad D to a multiple of 128 (lane-dense output
    # slab), pre-cast the MXU weight operands to bf16.
    prepared = []
    for j in range(n):
        x = xs[j]
        p = params[j]
        D = x.shape[-1]
        Dp = max(128, _round_up(D, 128))
        r = p["b4"].shape[1] // 4
        prepared.append({
            "D": D, "Dp": Dp, "r": r,
            "xp": _pad_last(x.astype(jnp.float32), Dp),
            "w4_bf": jnp.pad(p["w4"], ((0, Dp - D), (0, 0))).astype(jnp.bfloat16),
            "b4": p["b4"].astype(jnp.float32),
            "watt_bf": _pad_last(p["watt_flat"], Dp).astype(jnp.bfloat16),
            "batt": _pad_last(p["batt"], Dp).astype(jnp.float32),
        })

    # Stage 1: per-modal M_qk = mean_t a ⊗ b, single pass over x.
    m_list = [stage1(q["xp"], q["w4_bf"], q["b4"], vmem_limit) for q in prepared]

    outs = []
    for j in range(n):
        q = prepared[j]
        # Precompute P = prod_{l != j} M_l in the wrapper (ascending l, as in
        # the PyTorch loop); tiny O(B*n*r^3) cost, keeps the hot kernel clean.
        others = [m_list[l] for l in range(n) if l != j]
        if others:
            p_mat = others[0]
            for m in others[1:]:
                p_mat = jnp.einsum('bkl,blo->bko', p_mat, m)
        else:
            p_mat = jnp.broadcast_to(jnp.eye(q["r"], dtype=jnp.float32),
                                     (q["xp"].shape[0], q["r"], q["r"]))
        e1, e2 = _expand_mats(q["r"])
        out_p = stage2(q["xp"], q["w4_bf"], q["b4"], p_mat,
                       q["watt_bf"], q["batt"], e1, e2, beta, vmem_limit)
        outs.append(out_p[..., :q["D"]])
    return outs


# ---------------------------------------------------------------------------
# Deterministic parameter init (shapes from MMAttention.__init__)
# ---------------------------------------------------------------------------
def init_params(key, input_dim, rank):
    params = []
    for j, d in enumerate(input_dim):
        keys = jax.random.split(jax.random.fold_in(key, j), 10)

        def w(k, shape):
            return jax.random.normal(k, shape, jnp.float32) * 0.1

        p = {
            "wq1": w(keys[0], (d, rank)), "bq1": w(keys[1], (1, rank)),
            "wq2": w(keys[2], (d, rank)), "bq2": w(keys[3], (1, rank)),
            "wk1": w(keys[4], (d, rank)), "bk1": w(keys[5], (1, rank)),
            "wk2": w(keys[6], (d, rank)), "bk2": w(keys[7], (1, rank)),
            "watt_flat": w(keys[8], (rank * rank, d)),   # Linear(rank*rank, d), transposed
            "batt": w(keys[9], (1, d)),
        }
        # Fused projection: columns [q1 | q2 | k1 | k2]
        p["w4"] = jnp.concatenate([p["wq1"], p["wq2"], p["wk1"], p["wk2"]], axis=1)
        p["b4"] = jnp.concatenate([p["bq1"], p["bq2"], p["bk1"], p["bk2"]], axis=1)
        params.append(p)
    return params


# ---------------------------------------------------------------------------
# Pure-JAX f32 reference (mirrors the PyTorch forward literally)
# ---------------------------------------------------------------------------
def reference(xs, params, beta):
    n = len(xs)
    G_qk, M_qk = [], []
    for j in range(n):
        p = params[j]
        x = xs[j]
        q1 = x @ p["wq1"] + p["bq1"][0]
        q2 = x @ p["wq2"] + p["bq2"][0]
        k1 = x @ p["wk1"] + p["bk1"][0]
        k2 = x @ p["wk2"] + p["bk2"][0]
        G_q = q1[..., :, None] * q2[..., None, :]
        G_k = k1[..., :, None] * k2[..., None, :]
        G = G_q * G_k
        G_qk.append(G)
        M_qk.append(G.mean(axis=1))
    outs = []
    for j in range(n):
        att = G_qk[j]
        for l in range(n):
            if l == j:
                continue
            att = jnp.einsum('ijkl,ilo->ijko', att, M_qk[l])
        B, T, R1, R2 = att.shape
        att = att.reshape(B, T, R1 * R2)
        att = att @ params[j]["watt_flat"] + params[j]["batt"][0]
        outs.append(att * xs[j] + beta * xs[j])
    return outs


if __name__ == "__main__":
    key = jax.random.PRNGKey(0)
    input_dim = [32, 16]     # per-modal embed dims
    rank = 4
    n_modals = 2
    beta = 0.5
    B, T = 2, 8

    params = init_params(jax.random.fold_in(key, 123), input_dim, rank)
    xs = [jax.random.normal(jax.random.fold_in(key, 1000 + j),
                            (B, T, input_dim[j]), jnp.float32)
          for j in range(n_modals)]

    outs = mm_attention_forward(xs, params, beta)
    outs = jax.block_until_ready(outs)

    refs = reference(xs, params, beta)
    # bf16 MXU operands (f32 accumulate / f32 elementwise) -> looser tolerance
    # than the all-f32 variant.
    for o, ref in zip(outs, refs):
        np.testing.assert_allclose(np.asarray(o), np.asarray(ref),
                                   rtol=3e-2, atol=3e-2)
    print("KERNEL_OK")
</pallas_src>

<mosaic_0001>
module attributes {stable_mosaic.version = 11 : i64} {
  func.func @_stage1_kernel(%arg0: i32, %arg1: i32, %arg2: memref<1x8x128xf32, #tpu.memory_space<vmem>>, %arg3: memref<128x16xbf16, #tpu.memory_space<vmem>>, %arg4: memref<1x16xf32, #tpu.memory_space<vmem>>, %arg5: memref<1x4x4xf32, #tpu.memory_space<vmem>>, %arg6: memref<4x4xf32, #tpu.memory_space<vmem>>) attributes {dimension_semantics = [#tpu.dimension_semantics<parallel>, #tpu.dimension_semantics<arbitrary>], iteration_bounds = array<i64: 2, 1>, scalar_prefetch = 0 : i64, scratch_operands = 1 : i64, tpu.core_type = #tpu.core_type<tc>, window_params = [{transform_indices = @transform_0, window_bounds = array<i64: 1, 8, 128>}, {pipeline_mode = #tpu.pipeline_mode<synchronous>, transform_indices = @transform_1, window_bounds = array<i64: 128, 16>}, {pipeline_mode = #tpu.pipeline_mode<synchronous>, transform_indices = @transform_2, window_bounds = array<i64: 1, 16>}, {transform_indices = @transform_3, window_bounds = array<i64: 1, 4, 4>}]} {
    %c0_i32 = arith.constant 0 : i32
    %0 = arith.cmpi eq, %arg1, %c0_i32 : i32
    %1 = arith.extui %0 : i1 to i32
    %c0_i32_0 = arith.constant 0 : i32
    %2 = arith.cmpi ne, %1, %c0_i32_0 : i32
    scf.if %2 {
      %cst_14 = arith.constant 0.000000e+00 : f32
      %25 = vector.broadcast %cst_14 : f32 to vector<4x4xf32>
      %c0_15 = arith.constant 0 : index
      %c0_16 = arith.constant 0 : index
      %26 = vector.load %arg6[%c0_15, %c0_16] : memref<4x4xf32, #tpu.memory_space<vmem>>, vector<4x4xf32>
      tpu.vector_store %arg6[%c0_15, %c0_16], %25 {strides = array<i32>} : memref<4x4xf32, #tpu.memory_space<vmem>>, vector<4x4xf32>,
    } else {
    }
    %c0 = arith.constant 0 : index
    %c0_1 = arith.constant 0 : index
    %c0_2 = arith.constant 0 : index
    %3 = vector.load %arg2[%c0, %c0_1, %c0_2] : memref<1x8x128xf32, #tpu.memory_space<vmem>>, vector<1x8x128xf32>
    %4 = vector.shape_cast %3 : vector<1x8x128xf32> to vector<8x128xf32>
    %5 = arith.truncf %4 : vector<8x128xf32> to vector<8x128xbf16>
    %c0_3 = arith.constant 0 : index
    %c0_4 = arith.constant 0 : index
    %6 = vector.load %arg3[%c0_3, %c0_4] : memref<128x16xbf16, #tpu.memory_space<vmem>>, vector<128x16xbf16>
    %cst = arith.constant dense<0.000000e+00> : vector<8x16xf32>
    %7 = tpu.matmul %5, %6, %cst {dimension_numbers = #tpu.dot_dimension_numbers<[1], [0], [0], [1], [0, 0, 1, 1], [], []>} : vector<8x128xbf16>, vector<128x16xbf16>, vector<8x16xf32> -> vector<8x16xf32>
    %c0_5 = arith.constant 0 : index
    %c0_6 = arith.constant 0 : index
    %8 = vector.load %arg4[%c0_5, %c0_6] : memref<1x16xf32, #tpu.memory_space<vmem>>, vector<1x16xf32>
    %9 = vector.broadcast %8 : vector<1x16xf32> to vector<8x16xf32>
    %10 = arith.addf %7, %9 : vector<8x16xf32>
    %11 = vector.extract_strided_slice %10 {offsets = [0, 0], sizes = [8, 8], strides = [1, 1]} : vector<8x16xf32> to vector<8x8xf32>
    %12 = vector.extract_strided_slice %10 {offsets = [0, 8], sizes = [8, 8], strides = [1, 1]} : vector<8x16xf32> to vector<8x8xf32>
    %13 = arith.mulf %11, %12 : vector<8x8xf32>
    %14 = vector.extract_strided_slice %13 {offsets = [0, 0], sizes = [8, 4], strides = [1, 1]} : vector<8x8xf32> to vector<8x4xf32>
    %15 = vector.extract_strided_slice %13 {offsets = [0, 4], sizes = [8, 4], strides = [1, 1]} : vector<8x8xf32> to vector<8x4xf32>
    %c0_7 = arith.constant 0 : index
    %c0_8 = arith.constant 0 : index
    %16 = vector.load %arg6[%c0_7, %c0_8] : memref<4x4xf32, #tpu.memory_space<vmem>>, vector<4x4xf32>
    %17 = arith.truncf %14 : vector<8x4xf32> to vector<8x4xbf16>
    %18 = arith.truncf %15 : vector<8x4xf32> to vector<8x4xbf16>
    %cst_9 = arith.constant dense<0.000000e+00> : vector<4x4xf32>
    %19 = tpu.matmul %17, %18, %cst_9 {dimension_numbers = #tpu.dot_dimension_numbers<[0], [0], [1], [1], [0, 1, 1, 1], [], []>} : vector<8x4xbf16>, vector<8x4xbf16>, vector<4x4xf32> -> vector<4x4xf32>
    %20 = arith.addf %16, %19 : vector<4x4xf32>
    %c0_10 = arith.constant 0 : index
    %c0_11 = arith.constant 0 : index
    %21 = vector.load %arg6[%c0_10, %c0_11] : memref<4x4xf32, #tpu.memory_space<vmem>>, vector<4x4xf32>
    tpu.vector_store %arg6[%c0_10, %c0_11], %20 {strides = array<i32>} : memref<4x4xf32, #tpu.memory_space<vmem>>, vector<4x4xf32>,
    %c0_i32_12 = arith.constant 0 : i32
    %22 = arith.cmpi eq, %arg1, %c0_i32_12 : i32
    %23 = arith.extui %22 : i1 to i32
    %c0_i32_13 = arith.constant 0 : i32
    %24 = arith.cmpi ne, %23, %c0_i32_13 : i32
    scf.if %24 {
      %c0_14 = arith.constant 0 : index
      %c0_15 = arith.constant 0 : index
      %25 = vector.load %arg6[%c0_14, %c0_15] : memref<4x4xf32, #tpu.memory_space<vmem>>, vector<4x4xf32>
      %cst_16 = arith.constant 1.250000e-01 : f32
      %26 = vector.broadcast %cst_16 : f32 to vector<4x4xf32>
      %27 = arith.mulf %25, %26 : vector<4x4xf32>
      %c0_17 = arith.constant 0 : index
      %c0_18 = arith.constant 0 : index
      %c0_19 = arith.constant 0 : index
      %28 = vector.load %arg5[%c0_17, %c0_18, %c0_19] : memref<1x4x4xf32, #tpu.memory_space<vmem>>, vector<1x4x4xf32>
      %29 = vector.shape_cast %28 : vector<1x4x4xf32> to vector<4x4xf32>
      %30 = vector.shape_cast %27 : vector<4x4xf32> to vector<1x4x4xf32>
      tpu.vector_store %arg5[%c0_17, %c0_18, %c0_19], %30 {strides = array<i32>} : memref<1x4x4xf32, #tpu.memory_space<vmem>>, vector<1x4x4xf32>,
    } else {
    }
    return
  }
  func.func @transform_0(%arg0: i32, %arg1: i32) -> (i32, i32, i32) {
    %c0_i32 = arith.constant 0 : i32
    %c0_i32_0 = arith.constant 0 : i32
    return %arg0, %arg1, %c0_i32 : i32, i32, i32
  }
  func.func @transform_1(%arg0: i32, %arg1: i32) -> (i32, i32) {
    %c0_i32 = arith.constant 0 : i32
    %c0_i32_0 = arith.constant 0 : i32
    %c0_i32_1 = arith.constant 0 : i32
    return %c0_i32, %c0_i32_0 : i32, i32
  }
  func.func @transform_2(%arg0: i32, %arg1: i32) -> (i32, i32) {
    %c0_i32 = arith.constant 0 : i32
    %c0_i32_0 = arith.constant 0 : i32
    %c0_i32_1 = arith.constant 0 : i32
    return %c0_i32, %c0_i32_0 : i32, i32
  }
  func.func @transform_3(%arg0: i32, %arg1: i32) -> (i32, i32, i32) {
    %c0_i32 = arith.constant 0 : i32
    %c0_i32_0 = arith.constant 0 : i32
    %c0_i32_1 = arith.constant 0 : i32
    return %arg0, %c0_i32, %c0_i32_0 : i32, i32, i32
  }
}

</mosaic_0001>

<llo_original>
// kernel: tpu_custom_call.1
$region0: #{tpu_custom_call.1}
  #allocation0 [shape = 'u32[]', space=smem, size = 0x4, offset = 0x4, fixed_abs, tag = 'smem constant byte address 0x4 - core index']
  #allocation1 [shape = 'u32[72,128]{1,0:T(1,128)}', space=vmem, size = 0x9000, scoped, tag = 'internal scratch']
  #allocation2 [shape = 'f32[4,4]{1,0:T(4,128)}', space=vmem, size = 0x800, scoped, tag = 'scratch operand']
  %s0 = inlined_call_operand.vmem [shape: f32[2,8,128], index: 0, kind: input, shape index: {}]
  %s1 = inlined_call_operand.vmem [shape: bf16[128,16], index: 1, kind: input, shape index: {}]
  %s2 = inlined_call_operand.vmem [shape: f32[1,16], index: 2, kind: input, shape index: {}]
  %s3 = inlined_call_operand.hbm [shape: f32[2,4,4], index: 3, kind: output, shape index: {}]
  %s4 = sld [smem:[#allocation0]]
  $region53: #{tpu_custom_call.1} parent=0
    _
  %s6 = ssub.s32 1, %s4
  %s7 = scalar_select 0, %s6, %s4
  $region1: #{tpu_custom_call.1} parent=0
    #allocation3 [shape = 'u8[4096]{0}', space=vmem, size = 0x1000, scoped, tag = 'output window, operand 0']
    #allocation4 [shape = 's32[2]{0}', space=sflag, size = 0x8, scoped, tag = 'scoped memory for tpu_custom_call.1']
    %8 = vsyncpa [#allocation4], 0
    %s9 = scalar_lea.sflag [#allocation4], 1
    %10 = vsyncpa %s9, 0
    loop: start=0, step=1, limit=4
    $region2: #{tpu_custom_call.1} parent=1 // loop_pre_header
      _
    $region3: #{tpu_custom_call.1} parent=1 // loop_header
      %s12 = sphi 0, %s16
      %p13 = scmp.ge.s32.totalorder %s12, 4
      %s19 = sphi 0, %s31
      %s20 = sphi 0, %s27
      %s21 = sphi 0, %s19
      %s22 = sphi 0, %s20
      %s23 = sphi 0, %s21
      %s24 = sphi 0, %s22
      %s36 = sphi 0, %s38
      %s39 = sphi 0, %s36
      %s40 = sphi 0, %s39
      %s56 = sphi 0, %s40
      %s60 = sphi 0, %s60
      %s62 = sphi 0, %s60
      %s63 = sphi 0, %s62
      %s77 = sphi 0, %s63
      %s81 = sphi 0, %s81
      %s83 = sphi 0, %s81
      %s84 = sphi 0, %s83
      %s98 = sphi 0, %s84
      %s104 = sphi 0, %s106
      %s107 = sphi 0, %s104
      %s108 = sphi 0, %s107
      %s124 = sphi 0, %s108
    $region4: #{tpu_custom_call.1} parent=1 // loop_header_branch
      %15 = sbr.rel (%p13) target = $region8
    $region5: #{tpu_custom_call.1} parent=1 // loop_body
      %s17 = ssub.s32 %s12, 1
      %s18 = ssub.s32 %s12, 2
      %s25 = sadd.s32 1, %s20
      %p26 = scmp.ge.s32.totalorder %s25, 1
      %s27 = scalar_select %p26, 0, %s25
      %s28 = sadd.s32 1, %s19
      %s29 = scalar_select %p26, %s28, %s19
      %p30 = scmp.ge.s32.totalorder %s29, 2
      %s31 = scalar_select %p30, 0, %s29
      %s32 = ssub.s32 %s19, %s31
      %s33 = ssub.s32 %s20, %s27
      %s34 = sor.u32 %s32, %s33
      %p35 = scmp.eq.s32.totalorder %s34, 0
      %s37 = sadd.s32 %s36, 1
      %s38 = scalar_select %p35, %s36, %s37
      %p41 = pneg %p35
      %p42 = scmp.eq.s32.totalorder %s12, 1
      %p43 = por %p41, %p42
      %p44 = scmp.ne.s32.totalorder %s36, %s39
      %p45 = scmp.eq.s32.totalorder %s12, 0
      %p46 = por %p44, %p45
      %p47 = scmp.ne.s32.totalorder %s36, %s39
      %p48 = scmp.eq.s32.totalorder %s17, 1
      %p49 = por %p47, %p48
      %p50 = scmp.ne.s32.totalorder %s39, %s40
      %p51 = scmp.eq.s32.totalorder %s17, 0
      %p52 = por %p50, %p51
      %p53 = scmp.ne.s32.totalorder %s39, %s40
      %p54 = scmp.eq.s32.totalorder %s18, 1
      %p55 = por %p53, %p54
      %p57 = scmp.ne.s32.totalorder %s40, %s56
      %p58 = scmp.eq.s32.totalorder %s18, 0
      %p59 = por %p57, %p58
      %s61 = sadd.s32 %s60, 1
      %p64 = scmp.eq.s32.totalorder %s12, 1
      %p65 = scmp.ne.s32.totalorder %s60, %s62
      %p66 = scmp.eq.s32.totalorder %s12, 0
      %p67 = por %p65, %p66
      %p68 = scmp.ne.s32.totalorder %s60, %s62
      %p69 = scmp.eq.s32.totalorder %s17, 1
      %p70 = por %p68, %p69
      %p71 = scmp.ne.s32.totalorder %s62, %s63
      %p72 = scmp.eq.s32.totalorder %s17, 0
      %p73 = por %p71, %p72
      %p74 = scmp.ne.s32.totalorder %s62, %s63
      %p75 = scmp.eq.s32.totalorder %s18, 1
      %p76 = por %p74, %p75
      %p78 = scmp.ne.s32.totalorder %s63, %s77
      %p79 = scmp.eq.s32.totalorder %s18, 0
      %p80 = por %p78, %p79
      %s82 = sadd.s32 %s81, 1
      %p85 = scmp.eq.s32.totalorder %s12, 1
      %p86 = scmp.ne.s32.totalorder %s81, %s83
      %p87 = scmp.eq.s32.totalorder %s12, 0
      %p88 = por %p86, %p87
      %p89 = scmp.ne.s32.totalorder %s81, %s83
      %p90 = scmp.eq.s32.totalorder %s17, 1
      %p91 = por %p89, %p90
      %p92 = scmp.ne.s32.totalorder %s83, %s84
      %p93 = scmp.eq.s32.totalorder %s17, 0
      %p94 = por %p92, %p93
      %p95 = scmp.ne.s32.totalorder %s83, %s84
      %p96 = scmp.eq.s32.totalorder %s18, 1
      %p97 = por %p95, %p96
      %p99 = scmp.ne.s32.totalorder %s84, %s98
      %p100 = scmp.eq.s32.totalorder %s18, 0
      %p101 = por %p99, %p100
      %s102 = ssub.s32 %s19, %s31
      %p103 = scmp.eq.s32.totalorder %s102, 0
      %s105 = sadd.s32 %s104, 1
      %s106 = scalar_select %p103, %s104, %s105
      %p109 = pneg %p103
      %p110 = scmp.eq.s32.totalorder %s12, 1
      %p111 = por %p109, %p110
      %p112 = scmp.ne.s32.totalorder %s104, %s107
      %p113 = scmp.eq.s32.totalorder %s12, 0
      %p114 = por %p112, %p113
      %p115 = scmp.ne.s32.totalorder %s104, %s107
      %p116 = scmp.eq.s32.totalorder %s17, 1
      %p117 = por %p115, %p116
      %p118 = scmp.ne.s32.totalorder %s107, %s108
      %p119 = scmp.eq.s32.totalorder %s17, 0
      %p120 = por %p118, %p119
      %p121 = scmp.ne.s32.totalorder %s107, %s108
      %p122 = scmp.eq.s32.totalorder %s18, 1
      %p123 = por %p121, %p122
      %p125 = scmp.ne.s32.totalorder %s108, %s124
      %p126 = scmp.eq.s32.totalorder %s18, 0
      %p127 = por %p125, %p126
      %p128 = scmp.le.s32.totalorder 1, %s12
      %p129 = scmp.lt.s32.totalorder %s12, 3
      %p130 = pnand %p128, %p129
      %p131 = pneg %p130
      // Predicated region
      $region9: #{tpu_custom_call.1} parent=5 // pred_check
        _
      $region10: #{tpu_custom_call.1} parent=5 // pred_check_branch
        %133 = sbr.rel (%p130) target = $region12
      $region11: #{tpu_custom_call.1} parent=5 // pred_region
        %s134 = ssub.s32 %s12, 1
        // Predicated region
        $region13: #{tpu_custom_call.1} parent=11 // pred_check
          %p135 = pneg %p73
        $region14: #{tpu_custom_call.1} parent=11 // pred_check_branch
          %137 = sbr.rel (%p135) target = $region16
        $region15: #{tpu_custom_call.1} parent=11 // pred_region
          _
        $region16: #{tpu_custom_call.1} parent=11 // pred_fallthru
          _
        // Predicated region
        $region17: #{tpu_custom_call.1} parent=11 // pred_check
          %p138 = pneg %p94
        $region18: #{tpu_custom_call.1} parent=11 // pred_check_branch
          %140 = sbr.rel (%p138) target = $region20
        $region19: #{tpu_custom_call.1} parent=11 // pred_region
          _
        $region20: #{tpu_custom_call.1} parent=11 // pred_fallthru
          _
      $region12: #{tpu_custom_call.1} parent=5 // pred_fallthru
        _
      %p141 = scmp.lt.s32.totalorder %s12, 2
      // Predicated region
      $region21: #{tpu_custom_call.1} parent=5 // pred_check
        %p142 = pneg %p141
      $region22: #{tpu_custom_call.1} parent=5 // pred_check_branch
        %144 = sbr.rel (%p142) target = $region24
      $region23: #{tpu_custom_call.1} parent=5 // pred_region
        // Predicated region
        $region25: #{tpu_custom_call.1} parent=23 // pred_check
          %p145 = pneg %p46
        $region26: #{tpu_custom_call.1} parent=23 // pred_check_branch
          %147 = sbr.rel (%p145) target = $region28
        $region27: #{tpu_custom_call.1} parent=23 // pred_region
          %p148 = scmp.lt.s32.totalorder %s19, 1
          %s149 = scalar_select %p148, %s19, 1
          %p150 = scmp.lt.s32.totalorder %s20, 0
          %s151 = scalar_select %p150, %s20, 0
          %s152 = sadd.s32 %s151, %s149
          %s153 = smul.addr %s152, 8
          %s154 = scalar_lea.vmem %s0, %s153
        $region28: #{tpu_custom_call.1} parent=23 // pred_fallthru
          _
      $region24: #{tpu_custom_call.1} parent=5 // pred_fallthru
        _
      %p155 = scmp.le.s32.totalorder 1, %s12
      %p156 = scmp.lt.s32.totalorder %s12, 3
      %p157 = pnand %p155, %p156
      %p158 = pneg %p157
      // Predicated region
      $region29: #{tpu_custom_call.1} parent=5 // pred_check
        _
      $region30: #{tpu_custom_call.1} parent=5 // pred_check_branch
        %160 = sbr.rel (%p157) target = $region32
      $region31: #{tpu_custom_call.1} parent=5 // pred_region
        %s161 = ssub.s32 %s12, 1
        %p162 = scmp.lt.s32.totalorder %s21, 1
        %s163 = scalar_select %p162, %s21, 1
        %p164 = scmp.lt.s32.totalorder %s22, 0
        %s165 = scalar_select %p164, %s22, 0
        %s166 = sadd.s32 %s165, %s163
        %s167 = smul.addr %s166, 8
        %s168 = scalar_lea.vmem %s0, %s167
        %p169 = pneg %p52
        %p170 = pneg %p49
        %p171 = pneg %p73
        %p172 = pneg %p70
        %p173 = pneg %p94
        %p174 = pneg %p91
        %p175 = pneg %p120
        %p176 = pneg %p117
        %s177 = sand.u32 %s107, 1
        %s178 = scalar_lea.sflag [#allocation4], %s177
        %s179 = sand.u32 %s107, 1
        %s180 = smul.addr %s179, 4
        %s181 = scalar_lea.vmem [#allocation3], %s180
        %p182 = scmp.lt.s32.totalorder %s21, 1
        %s183 = scalar_select %p182, %s21, 1
        %p184 = scmp.lt.s32.totalorder %s22, 0
        %s185 = scalar_select %p184, %s22, 0
        %s186 = sadd.s32 %s185, %s183
        %s187 = smul.addr %s186, 8
        %s188 = scalar_lea.vmem %s0, %s187
        %p190 = scmp.eq.s32.totalorder %s22, 0
        // Predicated region
        $region33: #{tpu_custom_call.1} parent=31 // pred_check
          %p191 = pneg %p190
        $region34: #{tpu_custom_call.1} parent=31 // pred_check_branch
          %193 = sbr.rel (%p191) target = $region36
        $region35: #{tpu_custom_call.1} parent=31 // pred_region
          %vm194 = vcmask 27648
          %195 = vst.msk [vmem:[#allocation2] sm:$0xf] %vm194, 0.0
        $region36: #{tpu_custom_call.1} parent=31 // pred_fallthru
          _
        %v196 = vld [vmem:[%s188] sm:$0xff]
        %v197 = vpack.c.bf16 %v196, %v196
        %v198 = vld [vmem:[%s1] sm:$0xf]
        %v199 = vld [vmem:[%s1 + $0x4] sm:$0xf]
        %v200 = vld [vmem:[%s1 + $0x8] sm:$0xf]
        %v201 = vld [vmem:[%s1 + $0xc] sm:$0xf]
        %v202 = vld [vmem:[%s1 + $0x10] sm:$0xf]
        %v203 = vld [vmem:[%s1 + $0x14] sm:$0xf]
        %v204 = vld [vmem:[%s1 + $0x18] sm:$0xf]
        %v205 = vld [vmem:[%s1 + $0x1c] sm:$0xf]
        %v206 = vld [vmem:[%s1 + $0x20] sm:$0xf]
        %v207 = vld [vmem:[%s1 + $0x24] sm:$0xf]
        %v208 = vld [vmem:[%s1 + $0x28] sm:$0xf]
        %v209 = vld [vmem:[%s1 + $0x2c] sm:$0xf]
        %v210 = vld [vmem:[%s1 + $0x30] sm:$0xf]
        %v211 = vld [vmem:[%s1 + $0x34] sm:$0xf]
        %v212 = vld [vmem:[%s1 + $0x38] sm:$0xf]
        %v213 = vld [vmem:[%s1 + $0x3c] sm:$0xf]
        %v214 = vld [vmem:[%s2] sm:$0x1]
        %v216 = vperm.slane %v214, 0
        %v234 = vunpack.c.l.b16 %v198
        %v235 = vunpack.c.l.b16 %v199
        %v236 = vunpack.c.l.b16 %v200
        %v237 = vunpack.c.l.b16 %v201
        %v238 = vunpack.c.l.b16 %v202
        %v239 = vunpack.c.l.b16 %v203
        %v240 = vunpack.c.l.b16 %v204
        %v241 = vunpack.c.l.b16 %v205
        %v242 = vunpack.c.l.b16 %v206
        %v243 = vunpack.c.l.b16 %v207
        %v244 = vunpack.c.l.b16 %v208
        %v245 = vunpack.c.l.b16 %v209
        %v246 = vunpack.c.l.b16 %v210
        %v247 = vunpack.c.l.b16 %v211
        %v248 = vunpack.c.l.b16 %v212
        %v249 = vunpack.c.l.b16 %v213
        %v250 = vpack.c.b16 %v235, %v234
        %v251 = vpack.c.b16 %v237, %v236
        %v252 = vpack.c.b16 %v239, %v238
        %v253 = vpack.c.b16 %v241, %v240
        %v254 = vpack.c.b16 %v243, %v242
        %v255 = vpack.c.b16 %v245, %v244
        %v256 = vpack.c.b16 %v247, %v246
        %v257 = vpack.c.b16 %v249, %v248
        %266 = vmatpush.bf16.msra.mxu0 %v257
        %267 = vmatpush.bf16.msra.mxu0 %v256
        %268 = vmatpush.bf16.msra.mxu0 %v255
        %269 = vmatpush.bf16.msra.mxu0 %v254
        %270 = vmatpush.bf16.msra.mxu0 %v253
        %271 = vmatpush.bf16.msra.mxu0 %v252
        %272 = vmatpush.bf16.msra.mxu0 %v251
        %273 = vmatpush.bf16.msra.mxu0 %v250
        %274 = vmatmul.bf16.gmra.mxu0 %v197
        %v275 = vpop.f32.mrf.mxu0
        %v276 = vadd.f32 %v216, %v275
        %v277 = vpop.f32.mrf.mxu0
        %278 = vdwg.mxu0
        %280 = vrot.lane.b32.xlu0 %v276, 120
        %v281 = vpop.permute.xlu0 %280
        %v283 = vmul.f32 %v276, %v281
        %v284 = vld [vmem:[#allocation2] sm:$0xf]
        %v285 = vpack.c.bf16 %v283, %v283
        %286 = vxpose.xlu0.c.b16.start [1/8] %v285, 128
        %287 = vxpose.xlu0.c.b16.cont [2/8] 0, 128
        %288 = vxpose.xlu0.c.b16.cont [3/8] 0, 128
        %289 = vxpose.xlu0.c.b16.cont [4/8] 0, 128
        %290 = vxpose.xlu0.c.b16.cont [5/8] 0, 128
        %291 = vxpose.xlu0.c.b16.cont [6/8] 0, 128
        %292 = vxpose.xlu0.c.b16.cont [7/8] 0, 128
        %293 = vxpose.xlu0.c.b16.end [8/8] 0, 128
        %v294 = vpop.trf.xlu0
        %v295 = vpop.trf.xlu0
        %v296 = vpop.trf.xlu0
        %v297 = vpop.trf.xlu0
        %v298 = vpop.trf.xlu0
        %v299 = vpop.trf.xlu0
        %v300 = vpop.trf.xlu0
        %v301 = vpop.trf.xlu0
        %303 = vrot.lane.b32.xlu0 %v285, 124
        %v304 = vpop.permute.xlu0 %303
        %vm305 = vcmask 64512
        %v307 = vsel %vm305, %v294, 0
        %vm309 = vcmask 1043456
        %v311 = vsel %vm309, %v304, 0
        %313 = vmatpush.bf16.msra.mxu0 0
        %314 = vmatpush.bf16.msra.mxu0 0
        %315 = vmatpush.bf16.msra.mxu0 0
        %316 = vmatpush.bf16.msra.mxu0 0
        %317 = vmatpush.bf16.msra.mxu0 0
        %318 = vmatpush.bf16.msra.mxu0 0
        %319 = vmatpush.bf16.msra.mxu0 0
        %320 = vmatpush.bf16.msra.mxu0 %v311
        %321 = vmatmul.bf16.gmra.mxu0 %v307
        %v322 = vpop.f32.mrf.mxu0
        %v323 = vadd.f32 0.0, %v322
        %v324 = vpop.f32.mrf.mxu0
        %325 = vdwg.mxu0
        %v326 = vadd.f32 %v284, %v323
        %vm327 = vcmask 27648
        %328 = vst.msk [vmem:[#allocation2] sm:$0xf] %vm327, %v326
        // Predicated region
        $region37: #{tpu_custom_call.1} parent=31 // pred_check
          %p329 = pneg %p190
        $region38: #{tpu_custom_call.1} parent=31 // pred_check_branch
          %331 = sbr.rel (%p329) target = $region40
        $region39: #{tpu_custom_call.1} parent=31 // pred_region
          %v332 = vld [vmem:[#allocation2] sm:$0xf]
          %v333 = vmul.f32 %v332, 0.125
          %334 = vst.msk [vmem:[%s181] sm:$0xf] %vm327, %v333
        $region40: #{tpu_custom_call.1} parent=31 // pred_fallthru
          _
        %s335 = sand.u32 %s107, 1
        %s336 = scalar_lea.sflag [#allocation4], %s335
        %s337 = sand.u32 %s107, 1
        %s338 = smul.addr %s337, 4
        %s339 = scalar_lea.vmem [#allocation3], %s338
        // Predicated region
        $region41: #{tpu_custom_call.1} parent=31 // pred_check
          %p340 = pneg %p117
        $region42: #{tpu_custom_call.1} parent=31 // pred_check_branch
          %342 = sbr.rel (%p340) target = $region44
        $region43: #{tpu_custom_call.1} parent=31 // pred_region
          %344 = vsyncadd %s336, 0
          %s345 = smul.addr %s21, 4
          %s346 = scalar_lea.hbm %s3, %s345
          %s348 = sshll.u32 %s339, 4
          %s349 = int_to_ptr.vmem [resolvable:$true] %s348
          %s350 = sshll.u32 %s346, 4
          %s351 = int_to_ptr.hbm [resolvable:$true] %s350
          %353 = dma.vmem_to_hbm [thread:$0]  %s349, 64, %s351, %s336
        $region44: #{tpu_custom_call.1} parent=31 // pred_fallthru
          _
      $region32: #{tpu_custom_call.1} parent=5 // pred_fallthru
        _
      %p354 = scmp.le.s32.totalorder 2, %s12
      // Predicated region
      $region45: #{tpu_custom_call.1} parent=5 // pred_check
        %p355 = pneg %p354
      $region46: #{tpu_custom_call.1} parent=5 // pred_check_branch
        %357 = sbr.rel (%p355) target = $region48
      $region47: #{tpu_custom_call.1} parent=5 // pred_region
        %s358 = ssub.s32 %s12, 2
        // Predicated region
        $region49: #{tpu_custom_call.1} parent=47 // pred_check
          %p359 = pneg %p123
        $region50: #{tpu_custom_call.1} parent=47 // pred_check_branch
          %361 = sbr.rel (%p359) target = $region52
        $region51: #{tpu_custom_call.1} parent=47 // pred_region
          %s362 = sand.u32 %s108, 1
          %s363 = scalar_lea.sflag [#allocation4], %s362
          %s364 = sand.u32 %s108, 1
          %s365 = smul.addr %s364, 4
          %s366 = scalar_lea.vmem [#allocation3], %s365
          %368 = dma.done %s363, 64
        $region52: #{tpu_custom_call.1} parent=47 // pred_fallthru
          _
      $region48: #{tpu_custom_call.1} parent=5 // pred_fallthru
        _
    $region6: #{tpu_custom_call.1} parent=1 // loop_footer
      %s16 = sadd.s32 1, %s12
    $region7: #{tpu_custom_call.1} parent=1 // loop_footer_branch
      %11 = sbr.rel target = $region3
    $region8: #{tpu_custom_call.1} parent=1 // loop_exit
      _
    %369 = vsyncpa [#allocation4], 1
    %s370 = scalar_lea.sflag [#allocation4], 1
    %371 = vsyncpa %s370, 1

</llo_original>
